<compile_context>
chip_gen: v7x
topology: tpu7x:2x2x1
jax: 0.10.0
libtpu: 0.0.40
codegen_flags: <defaults>
</compile_context>

<pallas_src>
import functools

import jax
import jax.numpy as jnp
from jax.experimental import pallas as pl
from jax.experimental.pallas import tpu as pltpu


# ----------------------------- Pallas kernel --------------------------------

def cross_attention_kernel(x0_ref, xf_ref, wq_ref, wk_ref, wv_ref, wp_ref,
                           bp_ref, c2h_ref, h2c_ref, o_ref, *, scale, tb, n):
    """One grid step processes a tile of `tb` batch rows.

    Shapes inside the kernel (C = channels, H = heads):
      x0_ref : (tb, C)        first token of every batch row (for q)
      xf_ref : (tb * n, C)    all tokens, batch-major flattened (for k, v)
      wq/wk/wv/wp : (C, C)    projection weights, stored (in, out)
      bp_ref : (1, C)         output projection bias
      c2h_ref: (C, H)         one-hot channel -> head selector
      h2c_ref: (H, C)         its transpose
      o_ref  : (tb, C)        attention output (wrapper reshapes to (B, 1, C))
    """
    c = xf_ref.shape[1]
    h = c2h_ref.shape[1]

    xf = xf_ref[...]                     # (tb*n, C)  compute dtype (f32 / bf16)
    x0 = x0_ref[...]                     # (tb,   C)

    # Projections: one big (tb*n, C) x (C, C) matmul each for K and V; the Q
    # projection is batched over the tile, so it is no longer a 1-row GEMV.
    k = jnp.dot(xf, wk_ref[...], preferred_element_type=jnp.float32)   # (tb*n, C)
    v = jnp.dot(xf, wv_ref[...], preferred_element_type=jnp.float32)   # (tb*n, C)
    q = jnp.dot(x0, wq_ref[...], preferred_element_type=jnp.float32)   # (tb,   C)
    q = q * scale                        # fold 1/sqrt(head_dim) into q

    # Per-head logits without any lane-splitting reshape:
    #   s[b, t, h] = sum_{c in head h} q[b, c] * k[b, t, c]
    k3 = k.reshape(tb, n, c)                                           # f32
    qk = (k3 * q[:, None, :]).reshape(tb * n, c)                       # f32
    s = jnp.dot(qk, c2h_ref[...], preferred_element_type=jnp.float32)  # (tb*n, H)

    # Numerically stable softmax over the sequence axis, per (batch, head).
    s3 = s.reshape(tb, n, h)
    m = jnp.max(s3, axis=1, keepdims=True)
    p3 = jnp.exp(s3 - m)
    denom = jnp.sum(p3, axis=1, keepdims=True)
    p3 = p3 * pl.reciprocal(denom)       # exact reciprocal (keeps 1e-4 tolerance)
    p = p3.reshape(tb * n, h)

    # Broadcast head weights back to channels, contract over the sequence:
    #   ctx[b, c] = sum_t p[b, t, head(c)] * v[b, t, c]
    pf = jnp.dot(p, h2c_ref[...], preferred_element_type=jnp.float32)  # (tb*n, C)
    ctx = jnp.sum((pf * v).reshape(tb, n, c), axis=1)                  # (tb, C)

    # Output projection (with bias).
    out = jnp.dot(ctx, wp_ref[...], preferred_element_type=jnp.float32)
    out = out + bp_ref[...]
    o_ref[...] = out.astype(o_ref.dtype)


# -------------------------------- wrapper ------------------------------------

def _pick_batch_tile(b, cap=32):
    """Largest batch tile that divides b.  If tiling is actually needed
    (b > cap) prefer a multiple of 8 for sublane-aligned blocks."""
    if b <= cap:
        return b
    for tb in range(min(cap, b), 0, -1):
        if b % tb == 0 and (tb % 8 == 0 or tb == b):
            return tb
    return 1


def cross_attention(x, wq, wk, wv, wp, bp, *, num_heads, batch_tile=None,
                    compute_dtype=None):
    """x: (B, N, C); weights stored as (in, out): y = x @ W + b.

    compute_dtype: optionally cast x and the four CxC weights (e.g. to
    jnp.bfloat16 for the v6e/v7x MXU fast path); f32 accumulation is kept.
    """
    b, n, c = x.shape
    assert c % num_heads == 0
    d = c // num_heads
    scale = float(d) ** -0.5

    if compute_dtype is not None:
        x = x.astype(compute_dtype)
        wq = wq.astype(compute_dtype)
        wk = wk.astype(compute_dtype)
        wv = wv.astype(compute_dtype)
        wp = wp.astype(compute_dtype)
        bp = bp.astype(compute_dtype)

    tb = batch_tile if batch_tile is not None else _pick_batch_tile(b)
    assert b % tb == 0, (b, tb)

    # Free XLA-level reshapes/slices so the kernel sees lane-dense 2-D inputs.
    x_flat = x.reshape(b * n, c)          # all tokens, batch-major
    x0 = x[:, 0, :]                       # first token of each batch row

    # Head selector matrices (tiny constants, built at trace time).
    head_of_channel = jnp.arange(c, dtype=jnp.int32) // d                 # (C,)
    c2h = (head_of_channel[:, None]
           == jnp.arange(num_heads, dtype=jnp.int32)[None, :]
           ).astype(jnp.float32)                                          # (C, H)
    h2c = c2h.T                                                           # (H, C)

    kernel = functools.partial(cross_attention_kernel, scale=scale, tb=tb, n=n)

    x_bytes = int(x.dtype.itemsize)
    w_bytes = int(wq.dtype.itemsize)
    cost = pl.CostEstimate(
        flops=int(2 * 2 * b * n * c * c            # k, v projections
                  + 2 * 2 * b * c * c              # q + output projections
                  + 2 * 2 * b * n * c * num_heads  # selector matmuls
                  ),
        transcendentals=int(b * n * num_heads),
        bytes_accessed=int(4 * c * c * w_bytes + c * w_bytes
                           + (b * n * c + b * c) * x_bytes
                           + b * c * 4
                           + 2 * c * num_heads * 4),
    )

    # NOTE: the weight/constant blocks (wq..h2c) are grid-invariant; at large C
    # mark them single-buffered (pipeline_mode=pl.Buffered(1)) to halve their
    # VMEM footprint.  Left at default here (C is tiny; grid is short).
    out = pl.pallas_call(
        kernel,
        out_shape=jax.ShapeDtypeStruct((b, c), jnp.float32),
        grid=(b // tb,),
        in_specs=[
            pl.BlockSpec((tb, c), lambda i: (i, 0)),            # x0 (first token)
            pl.BlockSpec((tb * n, c), lambda i: (i, 0)),        # x_flat
            pl.BlockSpec((c, c), lambda i: (0, 0)),             # wq
            pl.BlockSpec((c, c), lambda i: (0, 0)),             # wk
            pl.BlockSpec((c, c), lambda i: (0, 0)),             # wv
            pl.BlockSpec((c, c), lambda i: (0, 0)),             # wp (proj)
            pl.BlockSpec((1, c), lambda i: (0, 0)),             # proj bias
            pl.BlockSpec((c, num_heads), lambda i: (0, 0)),     # channel -> head
            pl.BlockSpec((num_heads, c), lambda i: (0, 0)),     # head -> channel
        ],
        out_specs=pl.BlockSpec((tb, c), lambda i: (i, 0)),
        compiler_params=pltpu.CompilerParams(
            dimension_semantics=("parallel",)),
        cost_estimate=cost,
    )(x0, x_flat, wq, wk, wv, wp, bp.reshape(1, c), c2h, h2c)

    return out.reshape(b, 1, c)


# ------------------------- pure-JAX reference --------------------------------

def cross_attention_ref(x, wq, wk, wv, wp, bp, num_heads):
    b, n, c = x.shape
    d = c // num_heads
    scale = float(d) ** -0.5
    q = (x[:, 0:1, :] @ wq).reshape(b, 1, num_heads, d).transpose(0, 2, 1, 3)
    k = (x @ wk).reshape(b, n, num_heads, d).transpose(0, 2, 1, 3)
    v = (x @ wv).reshape(b, n, num_heads, d).transpose(0, 2, 1, 3)
    attn = (q @ jnp.swapaxes(k, -2, -1)) * scale
    attn = jax.nn.softmax(attn, axis=-1)
    out = (attn @ v).transpose(0, 2, 1, 3).reshape(b, 1, c)
    return out @ wp + bp


# ---------------------------------- main --------------------------------------

if __name__ == "__main__":
    B, N, C, H = 2, 8, 32, 8            # batch, seq, dim, num_heads (head_dim=4)

    key = jax.random.PRNGKey(0)
    kx, kq, kk, kv, kp, kb = jax.random.split(key, 6)
    init_scale = 1.0 / jnp.sqrt(jnp.float32(C))
    x = jax.random.normal(kx, (B, N, C), jnp.float32)
    wq = jax.random.normal(kq, (C, C), jnp.float32) * init_scale
    wk = jax.random.normal(kk, (C, C), jnp.float32) * init_scale
    wv = jax.random.normal(kv, (C, C), jnp.float32) * init_scale
    wp = jax.random.normal(kp, (C, C), jnp.float32) * init_scale
    bp = jax.random.normal(kb, (C,), jnp.float32) * init_scale

    ref = cross_attention_ref(x, wq, wk, wv, wp, bp, H)

    # f32 path (matches the PyTorch module's default dtype).
    fwd = jax.jit(functools.partial(cross_attention, num_heads=H))
    out = jax.block_until_ready(fwd(x, wq, wk, wv, wp, bp))
    assert out.shape == (B, 1, C), out.shape
    assert bool(jnp.all(jnp.isfinite(out)))
    assert bool(jnp.allclose(out, ref, atol=1e-4, rtol=1e-4)), \
        float(jnp.max(jnp.abs(out - ref)))

    # bf16-input path (v6e/v7x MXU fast path; f32 accumulation retained).
    fwd_bf16 = jax.jit(functools.partial(cross_attention, num_heads=H,
                                         compute_dtype=jnp.bfloat16))
    out_bf16 = jax.block_until_ready(fwd_bf16(x, wq, wk, wv, wp, bp))
    assert out_bf16.shape == (B, 1, C), out_bf16.shape
    assert bool(jnp.all(jnp.isfinite(out_bf16)))
    assert bool(jnp.allclose(out_bf16, ref, atol=5e-2, rtol=5e-2)), \
        float(jnp.max(jnp.abs(out_bf16 - ref)))

    print("KERNEL_OK")
</pallas_src>

<mosaic_0001>
module attributes {stable_mosaic.version = 11 : i64} {
  func.func @cross_attention_kernel(%arg0: i32, %arg1: memref<2x32xf32, #tpu.memory_space<vmem>>, %arg2: memref<16x32xf32, #tpu.memory_space<vmem>>, %arg3: memref<32x32xf32, #tpu.memory_space<vmem>>, %arg4: memref<32x32xf32, #tpu.memory_space<vmem>>, %arg5: memref<32x32xf32, #tpu.memory_space<vmem>>, %arg6: memref<32x32xf32, #tpu.memory_space<vmem>>, %arg7: memref<1x32xf32, #tpu.memory_space<vmem>>, %arg8: memref<32x8xf32, #tpu.memory_space<vmem>>, %arg9: memref<8x32xf32, #tpu.memory_space<vmem>>, %arg10: memref<2x32xf32, #tpu.memory_space<vmem>>) attributes {dimension_semantics = [#tpu.dimension_semantics<parallel>], iteration_bounds = array<i64: 1>, scalar_prefetch = 0 : i64, scratch_operands = 0 : i64, tpu.core_type = #tpu.core_type<tc>, window_params = [{transform_indices = @transform_0, window_bounds = array<i64: 2, 32>}, {transform_indices = @transform_1, window_bounds = array<i64: 16, 32>}, {pipeline_mode = #tpu.pipeline_mode<synchronous>, transform_indices = @transform_2, window_bounds = array<i64: 32, 32>}, {pipeline_mode = #tpu.pipeline_mode<synchronous>, transform_indices = @transform_3, window_bounds = array<i64: 32, 32>}, {pipeline_mode = #tpu.pipeline_mode<synchronous>, transform_indices = @transform_4, window_bounds = array<i64: 32, 32>}, {pipeline_mode = #tpu.pipeline_mode<synchronous>, transform_indices = @transform_5, window_bounds = array<i64: 32, 32>}, {pipeline_mode = #tpu.pipeline_mode<synchronous>, transform_indices = @transform_6, window_bounds = array<i64: 1, 32>}, {pipeline_mode = #tpu.pipeline_mode<synchronous>, transform_indices = @transform_7, window_bounds = array<i64: 32, 8>}, {pipeline_mode = #tpu.pipeline_mode<synchronous>, transform_indices = @transform_8, window_bounds = array<i64: 8, 32>}, {transform_indices = @transform_9, window_bounds = array<i64: 2, 32>}]} {
    %c0 = arith.constant 0 : index
    %c0_0 = arith.constant 0 : index
    %0 = vector.load %arg2[%c0, %c0_0] : memref<16x32xf32, #tpu.memory_space<vmem>>, vector<16x32xf32>
    %c0_1 = arith.constant 0 : index
    %c0_2 = arith.constant 0 : index
    %1 = vector.load %arg1[%c0_1, %c0_2] : memref<2x32xf32, #tpu.memory_space<vmem>>, vector<2x32xf32>
    %c0_3 = arith.constant 0 : index
    %c0_4 = arith.constant 0 : index
    %2 = vector.load %arg4[%c0_3, %c0_4] : memref<32x32xf32, #tpu.memory_space<vmem>>, vector<32x32xf32>
    %cst = arith.constant dense<0.000000e+00> : vector<16x32xf32>
    %3 = tpu.matmul %0, %2, %cst {dimension_numbers = #tpu.dot_dimension_numbers<[1], [0], [0], [1], [0, 0, 1, 1], [], []>} : vector<16x32xf32>, vector<32x32xf32>, vector<16x32xf32> -> vector<16x32xf32>
    %c0_5 = arith.constant 0 : index
    %c0_6 = arith.constant 0 : index
    %4 = vector.load %arg5[%c0_5, %c0_6] : memref<32x32xf32, #tpu.memory_space<vmem>>, vector<32x32xf32>
    %cst_7 = arith.constant dense<0.000000e+00> : vector<16x32xf32>
    %5 = tpu.matmul %0, %4, %cst_7 {dimension_numbers = #tpu.dot_dimension_numbers<[1], [0], [0], [1], [0, 0, 1, 1], [], []>} : vector<16x32xf32>, vector<32x32xf32>, vector<16x32xf32> -> vector<16x32xf32>
    %c0_8 = arith.constant 0 : index
    %c0_9 = arith.constant 0 : index
    %6 = vector.load %arg3[%c0_8, %c0_9] : memref<32x32xf32, #tpu.memory_space<vmem>>, vector<32x32xf32>
    %cst_10 = arith.constant dense<0.000000e+00> : vector<2x32xf32>
    %7 = tpu.matmul %1, %6, %cst_10 {dimension_numbers = #tpu.dot_dimension_numbers<[1], [0], [0], [1], [0, 0, 1, 1], [], []>} : vector<2x32xf32>, vector<32x32xf32>, vector<2x32xf32> -> vector<2x32xf32>
    %cst_11 = arith.constant 5.000000e-01 : f32
    %8 = vector.broadcast %cst_11 : f32 to vector<2x32xf32>
    %9 = arith.mulf %7, %8 : vector<2x32xf32>
    %10 = vector.shape_cast %3 : vector<16x32xf32> to vector<2x8x32xf32>
    %11 = vector.shape_cast %9 : vector<2x32xf32> to vector<2x1x32xf32>
    %12 = vector.broadcast %11 : vector<2x1x32xf32> to vector<2x8x32xf32>
    %13 = arith.mulf %10, %12 : vector<2x8x32xf32>
    %14 = vector.shape_cast %13 : vector<2x8x32xf32> to vector<16x32xf32>
    %c0_12 = arith.constant 0 : index
    %c0_13 = arith.constant 0 : index
    %15 = vector.load %arg8[%c0_12, %c0_13] : memref<32x8xf32, #tpu.memory_space<vmem>>, vector<32x8xf32>
    %cst_14 = arith.constant dense<0.000000e+00> : vector<16x8xf32>
    %16 = tpu.matmul %14, %15, %cst_14 {dimension_numbers = #tpu.dot_dimension_numbers<[1], [0], [0], [1], [0, 0, 1, 1], [], []>} : vector<16x32xf32>, vector<32x8xf32>, vector<16x8xf32> -> vector<16x8xf32>
    %17 = vector.shape_cast %16 : vector<16x8xf32> to vector<2x8x8xf32>
    %cst_15 = arith.constant dense<0xFF800000> : vector<2x8xf32>
    %18 = vector.multi_reduction <maximumf>, %17, %cst_15 [1] : vector<2x8x8xf32> to vector<2x8xf32>
    %19 = vector.shape_cast %18 : vector<2x8xf32> to vector<2x1x8xf32>
    %20 = vector.broadcast %19 : vector<2x1x8xf32> to vector<2x8x8xf32>
    %21 = arith.subf %17, %20 : vector<2x8x8xf32>
    %22 = math.exp %21 : vector<2x8x8xf32>
    %cst_16 = arith.constant dense<0.000000e+00> : vector<2x8xf32>
    %23 = vector.multi_reduction <add>, %22, %cst_16 [1] : vector<2x8x8xf32> to vector<2x8xf32>
    %24 = vector.shape_cast %23 : vector<2x8xf32> to vector<2x1x8xf32>
    %25 = tpu.reciprocal %24 : vector<2x1x8xf32> -> vector<2x1x8xf32>
    %26 = vector.broadcast %25 : vector<2x1x8xf32> to vector<2x8x8xf32>
    %27 = arith.mulf %22, %26 : vector<2x8x8xf32>
    %28 = vector.shape_cast %27 : vector<2x8x8xf32> to vector<16x8xf32>
    %c0_17 = arith.constant 0 : index
    %c0_18 = arith.constant 0 : index
    %29 = vector.load %arg9[%c0_17, %c0_18] : memref<8x32xf32, #tpu.memory_space<vmem>>, vector<8x32xf32>
    %cst_19 = arith.constant dense<0.000000e+00> : vector<16x32xf32>
    %30 = tpu.matmul %28, %29, %cst_19 {dimension_numbers = #tpu.dot_dimension_numbers<[1], [0], [0], [1], [0, 0, 1, 1], [], []>} : vector<16x8xf32>, vector<8x32xf32>, vector<16x32xf32> -> vector<16x32xf32>
    %31 = arith.mulf %30, %5 : vector<16x32xf32>
    %32 = vector.shape_cast %31 : vector<16x32xf32> to vector<2x8x32xf32>
    %cst_20 = arith.constant dense<0.000000e+00> : vector<2x32xf32>
    %33 = vector.multi_reduction <add>, %32, %cst_20 [1] : vector<2x8x32xf32> to vector<2x32xf32>
    %c0_21 = arith.constant 0 : index
    %c0_22 = arith.constant 0 : index
    %34 = vector.load %arg6[%c0_21, %c0_22] : memref<32x32xf32, #tpu.memory_space<vmem>>, vector<32x32xf32>
    %cst_23 = arith.constant dense<0.000000e+00> : vector<2x32xf32>
    %35 = tpu.matmul %33, %34, %cst_23 {dimension_numbers = #tpu.dot_dimension_numbers<[1], [0], [0], [1], [0, 0, 1, 1], [], []>} : vector<2x32xf32>, vector<32x32xf32>, vector<2x32xf32> -> vector<2x32xf32>
    %c0_24 = arith.constant 0 : index
    %c0_25 = arith.constant 0 : index
    %36 = vector.load %arg7[%c0_24, %c0_25] : memref<1x32xf32, #tpu.memory_space<vmem>>, vector<1x32xf32>
    %37 = vector.broadcast %36 : vector<1x32xf32> to vector<2x32xf32>
    %38 = arith.addf %35, %37 : vector<2x32xf32>
    %c0_26 = arith.constant 0 : index
    %c0_27 = arith.constant 0 : index
    %39 = vector.load %arg10[%c0_26, %c0_27] : memref<2x32xf32, #tpu.memory_space<vmem>>, vector<2x32xf32>
    tpu.vector_store %arg10[%c0_26, %c0_27], %38 {strides = array<i32>} : memref<2x32xf32, #tpu.memory_space<vmem>>, vector<2x32xf32>,
    return
  }
  func.func @transform_0(%arg0: i32) -> (i32, i32) {
    %c0_i32 = arith.constant 0 : i32
    %c0_i32_0 = arith.constant 0 : i32
    return %arg0, %c0_i32 : i32, i32
  }
  func.func @transform_1(%arg0: i32) -> (i32, i32) {
    %c0_i32 = arith.constant 0 : i32
    %c0_i32_0 = arith.constant 0 : i32
    return %arg0, %c0_i32 : i32, i32
  }
  func.func @transform_2(%arg0: i32) -> (i32, i32) {
    %c0_i32 = arith.constant 0 : i32
    %c0_i32_0 = arith.constant 0 : i32
    %c0_i32_1 = arith.constant 0 : i32
    return %c0_i32, %c0_i32_0 : i32, i32
  }
  func.func @transform_3(%arg0: i32) -> (i32, i32) {
    %c0_i32 = arith.constant 0 : i32
    %c0_i32_0 = arith.constant 0 : i32
    %c0_i32_1 = arith.constant 0 : i32
    return %c0_i32, %c0_i32_0 : i32, i32
  }
  func.func @transform_4(%arg0: i32) -> (i32, i32) {
    %c0_i32 = arith.constant 0 : i32
    %c0_i32_0 = arith.constant 0 : i32
    %c0_i32_1 = arith.constant 0 : i32
    return %c0_i32, %c0_i32_0 : i32, i32
  }
  func.func @transform_5(%arg0: i32) -> (i32, i32) {
    %c0_i32 = arith.constant 0 : i32
    %c0_i32_0 = arith.constant 0 : i32
    %c0_i32_1 = arith.constant 0 : i32
    return %c0_i32, %c0_i32_0 : i32, i32
  }
  func.func @transform_6(%arg0: i32) -> (i32, i32) {
    %c0_i32 = arith.constant 0 : i32
    %c0_i32_0 = arith.constant 0 : i32
    %c0_i32_1 = arith.constant 0 : i32
    return %c0_i32, %c0_i32_0 : i32, i32
  }
  func.func @transform_7(%arg0: i32) -> (i32, i32) {
    %c0_i32 = arith.constant 0 : i32
    %c0_i32_0 = arith.constant 0 : i32
    %c0_i32_1 = arith.constant 0 : i32
    return %c0_i32, %c0_i32_0 : i32, i32
  }
  func.func @transform_8(%arg0: i32) -> (i32, i32) {
    %c0_i32 = arith.constant 0 : i32
    %c0_i32_0 = arith.constant 0 : i32
    %c0_i32_1 = arith.constant 0 : i32
    return %c0_i32, %c0_i32_0 : i32, i32
  }
  func.func @transform_9(%arg0: i32) -> (i32, i32) {
    %c0_i32 = arith.constant 0 : i32
    %c0_i32_0 = arith.constant 0 : i32
    return %arg0, %c0_i32 : i32, i32
  }
}

</mosaic_0001>

<llo_original>
// kernel: cross_attention.1
$region0: #{cross_attention.1}
  #allocation0 [shape = 'u32[]', space=smem, size = 0x4, offset = 0x4, fixed_abs, tag = 'smem constant byte address 0x4 - core index']
  #allocation1 [shape = 'u32[144,128]{1,0:T(1,128)}', space=vmem, size = 0x12000, scoped, tag = 'internal scratch']
  %s0 = inlined_call_operand.vmem [shape: f32[2,32], index: 0, kind: input, shape index: {}]
  %s1 = inlined_call_operand.vmem [shape: f32[16,32], index: 1, kind: input, shape index: {}]
  %s2 = inlined_call_operand.vmem [shape: f32[32,32], index: 2, kind: input, shape index: {}]
  %s3 = inlined_call_operand.vmem [shape: f32[32,32], index: 3, kind: input, shape index: {}]
  %s4 = inlined_call_operand.hbm [shape: f32[32,32], index: 4, kind: input, shape index: {}]
  %s5 = inlined_call_operand.hbm [shape: f32[32,32], index: 5, kind: input, shape index: {}]
  %s6 = inlined_call_operand.hbm [shape: f32[1,32], index: 6, kind: input, shape index: {}]
  %s7 = inlined_call_operand.vmem [shape: f32[32,8], index: 7, kind: input, shape index: {}]
  %s8 = inlined_call_operand.vmem [shape: f32[8,32], index: 8, kind: input, shape index: {}]
  %s9 = inlined_call_operand.hbm [shape: f32[2,32], index: 9, kind: output, shape index: {}]
  %s10 = sld [smem:[#allocation0]]
  $region58: #{cross_attention.1} parent=0
    _
  %s12 = ssub.s32 1, %s10
  %s13 = scalar_select 0, %s12, %s10
  $region1: #{cross_attention.1} parent=0
    #allocation2 [shape = 'u8[16384]{0}', space=vmem, size = 0x4000, scoped, tag = 'input window, operand 4, single buffered']
    #allocation3 [shape = 's32[1]{0}', space=sflag, size = 0x4, scoped, tag = 'scoped memory for cross_attention.1']
    #allocation4 [shape = 's32[1]{0}', space=sflag, size = 0x4, scoped, tag = 'scoped memory for cross_attention.1']
    #allocation5 [shape = 'u8[16384]{0}', space=vmem, size = 0x4000, scoped, tag = 'input window, operand 5, single buffered']
    #allocation6 [shape = 's32[1]{0}', space=sflag, size = 0x4, scoped, tag = 'scoped memory for cross_attention.1']
    #allocation7 [shape = 'u8[512]{0}', space=vmem, size = 0x400, scoped, tag = 'input window, operand 6, single buffered']
    #allocation8 [shape = 'u8[1024]{0}', space=vmem, size = 0x400, scoped, tag = 'output window, operand 0, single buffered']
    %14 = vsyncpa [#allocation3], 0
    %15 = vsyncpa [#allocation6], 0
    %16 = vsyncpa [#allocation4], 0
    // Predicated region
    $region2: #{cross_attention.1} parent=1 // pred_check
      _
    $region3: #{cross_attention.1} parent=1 // pred_check_branch
      %18 = sbr.rel (0) target = $region5
    $region4: #{cross_attention.1} parent=1 // pred_region
      _
    $region5: #{cross_attention.1} parent=1 // pred_fallthru
      _
    // Predicated region
    $region6: #{cross_attention.1} parent=1 // pred_check
      _
    $region7: #{cross_attention.1} parent=1 // pred_check_branch
      %20 = sbr.rel (0) target = $region9
    $region8: #{cross_attention.1} parent=1 // pred_region
      _
    $region9: #{cross_attention.1} parent=1 // pred_fallthru
      _
    // Predicated region
    $region10: #{cross_attention.1} parent=1 // pred_check
      _
    $region11: #{cross_attention.1} parent=1 // pred_check_branch
      %22 = sbr.rel (0) target = $region13
    $region12: #{cross_attention.1} parent=1 // pred_region
      _
    $region13: #{cross_attention.1} parent=1 // pred_fallthru
      _
    // Predicated region
    $region14: #{cross_attention.1} parent=1 // pred_check
      _
    $region15: #{cross_attention.1} parent=1 // pred_check_branch
      %24 = sbr.rel (0) target = $region17
    $region16: #{cross_attention.1} parent=1 // pred_region
      _
    $region17: #{cross_attention.1} parent=1 // pred_fallthru
      _
    // Predicated region
    $region18: #{cross_attention.1} parent=1 // pred_check
      _
    $region19: #{cross_attention.1} parent=1 // pred_check_branch
      %26 = sbr.rel (0) target = $region21
    $region20: #{cross_attention.1} parent=1 // pred_region
      %s28 = ssub.s32 512, 512
      %29 = vsyncadd [#allocation3], %s28
      %s30 = sshll.u32 [#allocation2], 4
      %s31 = int_to_ptr.vmem [resolvable:$true] %s30
      %36 = dma.hbm_to_vmem [thread:$0]  %s4, 512, %s31, [#allocation3], 128, 128, 8
    $region21: #{cross_attention.1} parent=1 // pred_fallthru
      _
    // Predicated region
    $region22: #{cross_attention.1} parent=1 // pred_check
      _
    $region23: #{cross_attention.1} parent=1 // pred_check_branch
      %38 = sbr.rel (0) target = $region25
    $region24: #{cross_attention.1} parent=1 // pred_region
      %s40 = ssub.s32 512, 512
      %41 = vsyncadd [#allocation6], %s40
      %s42 = sshll.u32 [#allocation5], 4
      %s43 = int_to_ptr.vmem [resolvable:$true] %s42
      %48 = dma.hbm_to_vmem [thread:$0]  %s5, 512, %s43, [#allocation6], 128, 128, 8
    $region25: #{cross_attention.1} parent=1 // pred_fallthru
      _
    // Predicated region
    $region26: #{cross_attention.1} parent=1 // pred_check
      _
    $region27: #{cross_attention.1} parent=1 // pred_check_branch
      %50 = sbr.rel (0) target = $region29
    $region28: #{cross_attention.1} parent=1 // pred_region
      %s52 = ssub.s32 16, 16
      %53 = vsyncadd [#allocation6], %s52
      %s55 = sshll.u32 [#allocation7], 4
      %s56 = int_to_ptr.vmem [resolvable:$true] %s55
      %58 = dma.hbm_to_vmem [thread:$0]  %s6, 16, %s56, [#allocation6]
    $region29: #{cross_attention.1} parent=1 // pred_fallthru
      _
    // Predicated region
    $region30: #{cross_attention.1} parent=1 // pred_check
      _
    $region31: #{cross_attention.1} parent=1 // pred_check_branch
      %60 = sbr.rel (0) target = $region33
    $region32: #{cross_attention.1} parent=1 // pred_region
      _
    $region33: #{cross_attention.1} parent=1 // pred_fallthru
      _
    // Predicated region
    $region34: #{cross_attention.1} parent=1 // pred_check
      _
    $region35: #{cross_attention.1} parent=1 // pred_check_branch
      %62 = sbr.rel (0) target = $region37
    $region36: #{cross_attention.1} parent=1 // pred_region
      _
    $region37: #{cross_attention.1} parent=1 // pred_fallthru
      _
    // Predicated region
    $region38: #{cross_attention.1} parent=1 // pred_check
      _
    $region39: #{cross_attention.1} parent=1 // pred_check_branch
      %64 = sbr.rel (0) target = $region41
    $region40: #{cross_attention.1} parent=1 // pred_region
      %65 = dma.done [#allocation3], 512
    $region41: #{cross_attention.1} parent=1 // pred_fallthru
      _
    // Predicated region
    $region42: #{cross_attention.1} parent=1 // pred_check
      _
    $region43: #{cross_attention.1} parent=1 // pred_check_branch
      %67 = sbr.rel (0) target = $region45
    $region44: #{cross_attention.1} parent=1 // pred_region
      %68 = dma.done [#allocation6], 512
    $region45: #{cross_attention.1} parent=1 // pred_fallthru
      _
    // Predicated region
    $region46: #{cross_attention.1} parent=1 // pred_check
      _
    $region47: #{cross_attention.1} parent=1 // pred_check_branch
      %70 = sbr.rel (0) target = $region49
    $region48: #{cross_attention.1} parent=1 // pred_region
      %71 = dma.done [#allocation6], 16
    $region49: #{cross_attention.1} parent=1 // pred_fallthru
      _
    %v72 = vld [vmem:[%s1] sm:$0xff]
    %v73 = vld [vmem:[%s1 + $0x8] sm:$0xff]
    %v74 = vld [vmem:[%s0] sm:$0x3]
    %v75 = vld [vmem:[%s3] sm:$0xff]
    %v76 = vld [vmem:[%s3 + $0x8] sm:$0xff]
    %v77 = vld [vmem:[%s3 + $0x10] sm:$0xff]
    %v78 = vld [vmem:[%s3 + $0x18] sm:$0xff]
    %vm79 = vcmask 261120
    %v81 = vsel %vm79, %v72, 0
    %v84 = vsel %vm79, %v73, 0
    %86 = vmatprep.subr.mxu0 0.0
    %87 = vmatpush1.msra.mxu0 %v75
    %88 = vmatprep.subr.mxu0 0.0
    %89 = vmatpush1.msra.mxu0 %v76
    %90 = vmatprep.subr.mxu0 0.0
    %91 = vmatpush1.msra.mxu0 %v77
    %92 = vmatprep.subr.mxu0 0.0
    %93 = vmatpush1.msra.mxu0 %v78
    %94 = vmatprep.subr.mxu0 0.0
    %95 = vmatpush1.msra.mxu0 0.0
    %96 = vmatprep.subr.mxu0 0.0
    %97 = vmatpush1.msra.mxu0 0.0
    %98 = vmatprep.subr.mxu0 0.0
    %99 = vmatpush1.msra.mxu0 0.0
    %100 = vmatprep.subr.mxu0 0.0
    %101 = vmatpush1.msra.mxu0 0.0
    %102 = vmatprep.subr.mxu0 0.0
    %103 = vmatpush1.msra.mxu0 0.0
    %104 = vmatprep.subr.mxu0 0.0
    %105 = vmatpush1.msra.mxu0 0.0
    %106 = vmatprep.subr.mxu0 0.0
    %107 = vmatpush1.msra.mxu0 0.0
    %108 = vmatprep.subr.mxu0 0.0
    %109 = vmatpush1.msra.mxu0 0.0
    %110 = vmatprep.subr.mxu0 0.0
    %111 = vmatpush1.msra.mxu0 0.0
    %112 = vmatprep.subr.mxu0 0.0
    %113 = vmatpush1.msra.mxu0 0.0
    %114 = vmatprep.subr.mxu0 0.0
    %115 = vmatpush1.msra.mxu0 0.0
    %116 = vmatprep.subr.mxu0 0.0
    %117 = vmatpush1.msra.mxu0 0.0
    %118 = vmatprep.subr.mxu0 0.0
    %119 = vmatpush1.msra.mxu0 0.0
    %120 = vmatprep.subr.mxu0 0.0
    %121 = vmatpush1.msra.mxu0 0.0
    %122 = vmatprep.subr.mxu0 0.0
    %123 = vmatpush1.msra.mxu0 0.0
    %124 = vmatprep.subr.mxu0 0.0
    %125 = vmatpush1.msra.mxu0 0.0
    %126 = vmatprep.subr.mxu0 0.0
    %127 = vmatpush1.msra.mxu0 0.0
    %128 = vmatprep.subr.mxu0 0.0
    %129 = vmatpush1.msra.mxu0 0.0
    %130 = vmatprep.subr.mxu0 0.0
    %131 = vmatpush1.msra.mxu0 0.0
    %132 = vmatprep.subr.mxu0 0.0
    %133 = vmatpush1.msra.mxu0 0.0
    %134 = vmatprep.subr.mxu0 0.0
    %135 = vmatpush1.msra.mxu0 0.0
    %136 = vmatprep.subr.mxu0 0.0
    %137 = vmatpush1.msra.mxu0 0.0
    %138 = vmatprep.subr.mxu0 0.0
    %139 = vmatpush1.msra.mxu0 0.0
    %140 = vmatprep.subr.mxu0 0.0
    %141 = vmatpush1.msra.mxu0 0.0
    %142 = vmatprep.subr.mxu0 0.0
    %143 = vmatpush1.msra.mxu0 0.0
    %144 = vmatprep.subr.mxu0 0.0
    %145 = vmatpush1.msra.mxu0 0.0
    %146 = vmatprep.subr.mxu0 0.0
    %147 = vmatpush1.msra.mxu0 0.0
    %148 = vmatprep.subr.mxu0 0.0
    %149 = vmatpush1.msra.mxu0 0.0
    %150 = vmatprep.mubr.f32.mxu0 0.0
    %151 = vmatmul.mubr.f32.gmra.mrb[0].mxu0 %v81
    %v152 = vpop.f32.mrb[0].mxu0
    %v153 = vadd.f32 0.0, %v152
    %v154 = vpop.f32.mrb[0].mxu0
    %155 = vmatprep.mubr.f32.mxu0 0.0
    %156 = vmatmul.mubr.f32.gmra.mrb[0].mxu0 %v84
    %v157 = vpop.f32.mrb[0].mxu0
    %v158 = vadd.f32 0.0, %v157
    %v159 = vpop.f32.mrb[0].mxu0
    %160 = vdwg.mxu0
    %v161 = vld [vmem:[#allocation2] sm:$0xff]
    %v162 = vld [vmem:[#allocation2 + $0x8] sm:$0xff]
    %v163 = vld [vmem:[#allocation2 + $0x10] sm:$0xff]
    %v164 = vld [vmem:[#allocation2 + $0x18] sm:$0xff]
    %165 = vmatprep.subr.mxu0 0.0
    %166 = vmatpush1.msra.mxu0 %v161
    %167 = vmatprep.subr.mxu0 0.0
    %168 = vmatpush1.msra.mxu0 %v162
    %169 = vmatprep.subr.mxu0 0.0
    %170 = vmatpush1.msra.mxu0 %v163
    %171 = vmatprep.subr.mxu0 0.0
    %172 = vmatpush1.msra.mxu0 %v164
    %173 = vmatprep.subr.mxu0 0.0
    %174 = vmatpush1.msra.mxu0 0.0
    %175 = vmatprep.subr.mxu0 0.0
    %176 = vmatpush1.msra.mxu0 0.0
    %177 = vmatprep.subr.mxu0 0.0
    %178 = vmatpush1.msra.mxu0 0.0
    %179 = vmatprep.subr.mxu0 0.0
    %180 = vmatpush1.msra.mxu0 0.0
    %181 = vmatprep.subr.mxu0 0.0
    %182 = vmatpush1.msra.mxu0 0.0
    %183 = vmatprep.subr.mxu0 0.0
    %184 = vmatpush1.msra.mxu0 0.0
    %185 = vmatprep.subr.mxu0 0.0
    %186 = vmatpush1.msra.mxu0 0.0
    %187 = vmatprep.subr.mxu0 0.0
    %188 = vmatpush1.msra.mxu0 0.0
    %189 = vmatprep.subr.mxu0 0.0
    %190 = vmatpush1.msra.mxu0 0.0
    %191 = vmatprep.subr.mxu0 0.0
    %192 = vmatpush1.msra.mxu0 0.0
    %193 = vmatprep.subr.mxu0 0.0
    %194 = vmatpush1.msra.mxu0 0.0
    %195 = vmatprep.subr.mxu0 0.0
    %196 = vmatpush1.msra.mxu0 0.0
    %197 = vmatprep.subr.mxu0 0.0
    %198 = vmatpush1.msra.mxu0 0.0
    %199 = vmatprep.subr.mxu0 0.0
    %200 = vmatpush1.msra.mxu0 0.0
    %201 = vmatprep.subr.mxu0 0.0
    %202 = vmatpush1.msra.mxu0 0.0
    %203 = vmatprep.subr.mxu0 0.0
    %204 = vmatpush1.msra.mxu0 0.0
    %205 = vmatprep.subr.mxu0 0.0
    %206 = vmatpush1.msra.mxu0 0.0
    %207 = vmatprep.subr.mxu0 0.0
    %208 = vmatpush1.msra.mxu0 0.0
    %209 = vmatprep.subr.mxu0 0.0
    %210 = vmatpush1.msra.mxu0 0.0
    %211 = vmatprep.subr.mxu0 0.0
    %212 = vmatpush1.msra.mxu0 0.0
    %213 = vmatprep.subr.mxu0 0.0
    %214 = vmatpush1.msra.mxu0 0.0
    %215 = vmatprep.subr.mxu0 0.0
    %216 = vmatpush1.msra.mxu0 0.0
    %217 = vmatprep.subr.mxu0 0.0
    %218 = vmatpush1.msra.mxu0 0.0
    %219 = vmatprep.subr.mxu0 0.0
    %220 = vmatpush1.msra.mxu0 0.0
    %221 = vmatprep.subr.mxu0 0.0
    %222 = vmatpush1.msra.mxu0 0.0
    %223 = vmatprep.subr.mxu0 0.0
    %224 = vmatpush1.msra.mxu0 0.0
    %225 = vmatprep.subr.mxu0 0.0
    %226 = vmatpush1.msra.mxu0 0.0
    %227 = vmatprep.subr.mxu0 0.0
    %228 = vmatpush1.msra.mxu0 0.0
    %229 = vmatprep.mubr.f32.mxu0 0.0
    %230 = vmatmul.mubr.f32.gmra.mrb[0].mxu0 %v81
    %v231 = vpop.f32.mrb[0].mxu0
    %v232 = vadd.f32 0.0, %v231
    %v233 = vpop.f32.mrb[0].mxu0
    %234 = vmatprep.mubr.f32.mxu0 0.0
    %235 = vmatmul.mubr.f32.gmra.mrb[0].mxu0 %v84
    %v236 = vpop.f32.mrb[0].mxu0
    %v237 = vadd.f32 0.0, %v236
    %v238 = vpop.f32.mrb[0].mxu0
    %239 = vdwg.mxu0
    %v240 = vld [vmem:[%s2] sm:$0xff]
    %v241 = vld [vmem:[%s2 + $0x8] sm:$0xff]
    %v242 = vld [vmem:[%s2 + $0x10] sm:$0xff]
    %v243 = vld [vmem:[%s2 + $0x18] sm:$0xff]
    %v245 = vsel %vm79, %v74, 0
    %247 = vmatprep.subr.mxu0 0.0
    %248 = vmatpush1.msra.mxu0 %v240
    %249 = vmatprep.subr.mxu0 0.0
    %250 = vmatpush1.msra.mxu0 %v241
    %251 = vmatprep.subr.mxu0 0.0
    %252 = vmatpush1.msra.mxu0 %v242
    %253 = vmatprep.subr.mxu0 0.0
    %254 = vmatpush1.msra.mxu0 %v243
    %255 = vmatprep.subr.mxu0 0.0
    %256 = vmatpush1.msra.mxu0 0.0
    %257 = vmatprep.subr.mxu0 0.0
    %258 = vmatpush1.msra.mxu0 0.0
    %259 = vmatprep.subr.mxu0 0.0
    %260 = vmatpush1.msra.mxu0 0.0
    %261 = vmatprep.subr.mxu0 0.0
    %262 = vmatpush1.msra.mxu0 0.0
    %263 = vmatprep.subr.mxu0 0.0
    %264 = vmatpush1.msra.mxu0 0.0
    %265 = vmatprep.subr.mxu0 0.0
    %266 = vmatpush1.msra.mxu0 0.0
    %267 = vmatprep.subr.mxu0 0.0
    %268 = vmatpush1.msra.mxu0 0.0
    %269 = vmatprep.subr.mxu0 0.0
    %270 = vmatpush1.msra.mxu0 0.0
    %271 = vmatprep.subr.mxu0 0.0
    %272 = vmatpush1.msra.mxu0 0.0
    %273 = vmatprep.subr.mxu0 0.0
    %274 = vmatpush1.msra.mxu0 0.0
    %275 = vmatprep.subr.mxu0 0.0
    %276 = vmatpush1.msra.mxu0 0.0
    %277 = vmatprep.subr.mxu0 0.0
    %278 = vmatpush1.msra.mxu0 0.0
    %279 = vmatprep.subr.mxu0 0.0
    %280 = vmatpush1.msra.mxu0 0.0
    %281 = vmatprep.subr.mxu0 0.0
    %282 = vmatpush1.msra.mxu0 0.0
    %283 = vmatprep.subr.mxu0 0.0
    %284 = vmatpush1.msra.mxu0 0.0
    %285 = vmatprep.subr.mxu0 0.0
    %286 = vmatpush1.msra.mxu0 0.0
    %287 = vmatprep.subr.mxu0 0.0
    %288 = vmatpush1.msra.mxu0 0.0
    %289 = vmatprep.subr.mxu0 0.0
    %290 = vmatpush1.msra.mxu0 0.0
    %291 = vmatprep.subr.mxu0 0.0
    %292 = vmatpush1.msra.mxu0 0.0
    %293 = vmatprep.subr.mxu0 0.0
    %294 = vmatpush1.msra.mxu0 0.0
    %295 = vmatprep.subr.mxu0 0.0
    %296 = vmatpush1.msra.mxu0 0.0
    %297 = vmatprep.subr.mxu0 0.0
    %298 = vmatpush1.msra.mxu0 0.0
    %299 = vmatprep.subr.mxu0 0.0
    %300 = vmatpush1.msra.mxu0 0.0
    %301 = vmatprep.subr.mxu0 0.0
    %302 = vmatpush1.msra.mxu0 0.0
    %303 = vmatprep.subr.mxu0 0.0
    %304 = vmatpush1.msra.mxu0 0.0
    %305 = vmatprep.subr.mxu0 0.0
    %306 = vmatpush1.msra.mxu0 0.0
    %307 = vmatprep.subr.mxu0 0.0
    %308 = vmatpush1.msra.mxu0 0.0
    %309 = vmatprep.subr.mxu0 0.0
    %310 = vmatpush1.msra.mxu0 0.0
    %311 = vmatprep.mubr.f32.mxu0 0.0
    %312 = vmatmul.mubr.f32.gmra.mrb[0].mxu0 %v245
    %v313 = vpop.f32.mrb[0].mxu0
    %v314 = vadd.f32 0.0, %v313
    %v315 = vpop.f32.mrb[0].mxu0
    %316 = vdwg.mxu0
    %v317 = vmul.f32 %v314, 0.5
    %v320 = vunpack.c.l.s4 1966171168
    %v321 = vunpack.c.0.s8 %v320
    %v322 = vlaneseq
    %v323 = vshrl.u32 %v322, 7
    %v324 = vsub.s32 %v321, %v323
    %v325 = vrot.slane %v317, %v324
    %v326 = vcombine.high %v325, %v325
    %v328 = vunpack.c.l.s4 1966171168
    %v329 = vunpack.c.0.s8 %v328
    %v330 = vlaneseq
    %v331 = vshrl.u32 %v330, 7
    %v332 = vsub.s32 %v329, %v331
    %v333 = vrot.slane %v325, %v332
    %v335 = vunpack.c.l.s4 1966171168
    %v336 = vunpack.c.0.s8 %v335
    %v337 = vlaneseq
    %v338 = vshrl.u32 %v337, 7
    %v339 = vsub.s32 %v336, %v338
    %v340 = vrot.slane %v326, %v339
    %v341 = vlaneseq
    %v342 = vshrl.u32 %v341, 7
    %v343 = vsub.s32 0, %v342
    %v344 = vrot.slane %v333, %v343
    %v345 = vlaneseq
    %v346 = vshrl.u32 %v345, 7
    %v347 = vsub.s32 0, %v346
    %v348 = vrot.slane %v340, %v347
    %v351 = vmul.f32 %v153, %v344
    %v352 = vmul.f32 %v158, %v348
    %v353 = vld [vmem:[%s7] sm:$0xff]
    %v354 = vld [vmem:[%s7 + $0x8] sm:$0xff]
    %v355 = vld [vmem:[%s7 + $0x10] sm:$0xff]
    %v356 = vld [vmem:[%s7 + $0x18] sm:$0xff]
    %v358 = vsel %vm79, %v351, 0
    %v361 = vsel %vm79, %v352, 0
    %363 = vmatprep.subr.mxu0 0.0
    %364 = vmatpush1.msra.mxu0 %v353
    %365 = vmatprep.subr.mxu0 0.0
    %366 = vmatpush1.msra.mxu0 %v354
    %367 = vmatprep.subr.mxu0 0.0
    %368 = vmatpush1.msra.mxu0 %v355
    %369 = vmatprep.subr.mxu0 0.0
    %370 = vmatpush1.msra.mxu0 %v356
    %371 = vmatprep.subr.mxu0 0.0
    %372 = vmatpush1.msra.mxu0 0.0
    %373 = vmatprep.subr.mxu0 0.0
    %374 = vmatpush1.msra.mxu0 0.0
    %375 = vmatprep.subr.mxu0 0.0
    %376 = vmatpush1.msra.mxu0 0.0
    %377 = vmatprep.subr.mxu0 0.0
    %378 = vmatpush1.msra.mxu0 0.0
    %379 = vmatprep.subr.mxu0 0.0
    %380 = vmatpush1.msra.mxu0 0.0
    %381 = vmatprep.subr.mxu0 0.0
    %382 = vmatpush1.msra.mxu0 0.0
    %383 = vmatprep.subr.mxu0 0.0
    %384 = vmatpush1.msra.mxu0 0.0
    %385 = vmatprep.subr.mxu0 0.0
    %386 = vmatpush1.msra.mxu0 0.0
    %387 = vmatprep.subr.mxu0 0.0
    %388 = vmatpush1.msra.mxu0 0.0
    %389 = vmatprep.subr.mxu0 0.0
    %390 = vmatpush1.msra.mxu0 0.0
    %391 = vmatprep.subr.mxu0 0.0
    %392 = vmatpush1.msra.mxu0 0.0
    %393 = vmatprep.subr.mxu0 0.0
    %394 = vmatpush1.msra.mxu0 0.0
    %395 = vmatprep.subr.mxu0 0.0
    %396 = vmatpush1.msra.mxu0 0.0
    %397 = vmatprep.subr.mxu0 0.0
    %398 = vmatpush1.msra.mxu0 0.0
    %399 = vmatprep.subr.mxu0 0.0
    %400 = vmatpush1.msra.mxu0 0.0
    %401 = vmatprep.subr.mxu0 0.0
    %402 = vmatpush1.msra.mxu0 0.0
    %403 = vmatprep.subr.mxu0 0.0
    %404 = vmatpush1.msra.mxu0 0.0
    %405 = vmatprep.subr.mxu0 0.0
    %406 = vmatpush1.msra.mxu0 0.0
    %407 = vmatprep.subr.mxu0 0.0
    %408 = vmatpush1.msra.mxu0 0.0
    %409 = vmatprep.subr.mxu0 0.0
    %410 = vmatpush1.msra.mxu0 0.0
    %411 = vmatprep.subr.mxu0 0.0
    %412 = vmatpush1.msra.mxu0 0.0
    %413 = vmatprep.subr.mxu0 0.0
    %414 = vmatpush1.msra.mxu0 0.0
    %415 = vmatprep.subr.mxu0 0.0
    %416 = vmatpush1.msra.mxu0 0.0
    %417 = vmatprep.subr.mxu0 0.0
    %418 = vmatpush1.msra.mxu0 0.0
    %419 = vmatprep.subr.mxu0 0.0
    %420 = vmatpush1.msra.mxu0 0.0
    %421 = vmatprep.subr.mxu0 0.0
    %422 = vmatpush1.msra.mxu0 0.0
    %423 = vmatprep.subr.mxu0 0.0
    %424 = vmatpush1.msra.mxu0 0.0
    %425 = vmatprep.subr.mxu0 0.0
    %426 = vmatpush1.msra.mxu0 0.0
    %427 = vmatprep.mubr.f32.mxu0 0.0
    %428 = vmatmul.mubr.f32.gmra.mrb[0].mxu0 %v358
    %v429 = vpop.f32.mrb[0].mxu0
    %v430 = vadd.f32 0.0, %v429
    %v431 = vpop.f32.mrb[0].mxu0
    %432 = vmatprep.mubr.f32.mxu0 0.0
    %433 = vmatmul.mubr.f32.gmra.mrb[0].mxu0 %v361
    %v434 = vpop.f32.mrb[0].mxu0
    %v435 = vadd.f32 0.0, %v434
    %v436 = vpop.f32.mrb[0].mxu0
    %437 = vdwg.mxu0
    %vm438 = vcmask 64512
    %v439 = vsel %vm438, %v430, -inf
    %v440 = vrot.slane %v439, 4
    %v441 = vmax.f32 %v439, %v440
    %v442 = vrot.slane %v441, 2
    %v443 = vmax.f32 %v441, %v442
    %v444 = vrot.slane %v443, 1
    %v445 = vmax.f32 %v443, %v444
    %v446 = vsel %vm438, %v435, -inf
    %v447 = vrot.slane %v446, 4
    %v448 = vmax.f32 %v446, %v447
    %v449 = vrot.slane %v448, 2
    %v450 = vmax.f32 %v448, %v449
    %v451 = vrot.slane %v450, 1
    %v452 = vmax.f32 %v450, %v451
    %v453 = vsub.f32 %v430, %v445
    %v454 = vsub.f32 %v435, %v452
    %v455 = vmul.f32 %v453, 1.442695
    %v456 = vpow.pop %v455
    %v457 = vmul.f32 %v454, 1.442695
    %v458 = vpow.pop %v457
    %v459 = vsel %vm438, %v456, 0.0
    %v460 = vrot.slane %v459, 4
    %v461 = vadd.f32 %v459, %v460
    %v462 = vrot.slane %v461, 2
    %v463 = vadd.f32 %v461, %v462
    %v464 = vrot.slane %v463, 1
    %v465 = vadd.f32 %v463, %v464
    %v466 = vsel %vm438, %v458, 0.0
    %v467 = vrot.slane %v466, 4
    %v468 = vadd.f32 %v466, %v467
    %v469 = vrot.slane %v468, 2
    %v470 = vadd.f32 %v468, %v469
    %v471 = vrot.slane %v470, 1
    %v472 = vadd.f32 %v470, %v471
    %v473 = vrcp.pop %v465
    %v474 = vrcp.pop %v472
    %v475 = vmul.f32 %v456, %v473
    %v476 = vmul.f32 %v458, %v474
    %v477 = vld [vmem:[%s8] sm:$0xff]
    %v479 = vsel %vm438, %v475, 0
    %v482 = vsel %vm438, %v476, 0
    %484 = vmatprep.subr.mxu0 0.0
    %485 = vmatpush1.msra.mxu0 %v477
    %486 = vmatprep.subr.mxu0 0.0
    %487 = vmatpush1.msra.mxu0 0.0
    %488 = vmatprep.subr.mxu0 0.0
    %489 = vmatpush1.msra.mxu0 0.0
    %490 = vmatprep.subr.mxu0 0.0
    %491 = vmatpush1.msra.mxu0 0.0
    %492 = vmatprep.subr.mxu0 0.0
    %493 = vmatpush1.msra.mxu0 0.0
    %494 = vmatprep.subr.mxu0 0.0
    %495 = vmatpush1.msra.mxu0 0.0
    %496 = vmatprep.subr.mxu0 0.0
    %497 = vmatpush1.msra.mxu0 0.0
    %498 = vmatprep.subr.mxu0 0.0
    %499 = vmatpush1.msra.mxu0 0.0
    %500 = vmatprep.subr.mxu0 0.0
    %501 = vmatpush1.msra.mxu0 0.0
    %502 = vmatprep.subr.mxu0 0.0
    %503 = vmatpush1.msra.mxu0 0.0
    %504 = vmatprep.subr.mxu0 0.0
    %505 = vmatpush1.msra.mxu0 0.0
    %506 = vmatprep.subr.mxu0 0.0
    %507 = vmatpush1.msra.mxu0 0.0
    %508 = vmatprep.subr.mxu0 0.0
    %509 = vmatpush1.msra.mxu0 0.0
    %510 = vmatprep.subr.mxu0 0.0
    %511 = vmatpush1.msra.mxu0 0.0
    %512 = vmatprep.subr.mxu0 0.0
    %513 = vmatpush1.msra.mxu0 0.0
    %514 = vmatprep.subr.mxu0 0.0
    %515 = vmatpush1.msra.mxu0 0.0
    %516 = vmatprep.subr.mxu0 0.0
    %517 = vmatpush1.msra.mxu0 0.0
    %518 = vmatprep.subr.mxu0 0.0
    %519 = vmatpush1.msra.mxu0 0.0
    %520 = vmatprep.subr.mxu0 0.0
    %521 = vmatpush1.msra.mxu0 0.0
    %522 = vmatprep.subr.mxu0 0.0
    %523 = vmatpush1.msra.mxu0 0.0
    %524 = vmatprep.subr.mxu0 0.0
    %525 = vmatpush1.msra.mxu0 0.0
    %526 = vmatprep.subr.mxu0 0.0
    %527 = vmatpush1.msra.mxu0 0.0
    %528 = vmatprep.subr.mxu0 0.0
    %529 = vmatpush1.msra.mxu0 0.0
    %530 = vmatprep.subr.mxu0 0.0
    %531 = vmatpush1.msra.mxu0 0.0
    %532 = vmatprep.subr.mxu0 0.0
    %533 = vmatpush1.msra.mxu0 0.0
    %534 = vmatprep.subr.mxu0 0.0
    %535 = vmatpush1.msra.mxu0 0.0
    %536 = vmatprep.subr.mxu0 0.0
    %537 = vmatpush1.msra.mxu0 0.0
    %538 = vmatprep.subr.mxu0 0.0
    %539 = vmatpush1.msra.mxu0 0.0
    %540 = vmatprep.subr.mxu0 0.0
    %541 = vmatpush1.msra.mxu0 0.0
    %542 = vmatprep.subr.mxu0 0.0
    %543 = vmatpush1.msra.mxu0 0.0
    %544 = vmatprep.subr.mxu0 0.0
    %545 = vmatpush1.msra.mxu0 0.0
    %546 = vmatprep.subr.mxu0 0.0
    %547 = vmatpush1.msra.mxu0 0.0
    %548 = vmatprep.mubr.f32.mxu0 0.0
    %549 = vmatmul.mubr.f32.gmra.mrb[0].mxu0 %v479
    %v550 = vpop.f32.mrb[0].mxu0
    %v551 = vadd.f32 0.0, %v550
    %v552 = vpop.f32.mrb[0].mxu0
    %553 = vmatprep.mubr.f32.mxu0 0.0
    %554 = vmatmul.mubr.f32.gmra.mrb[0].mxu0 %v482
    %v555 = vpop.f32.mrb[0].mxu0
    %v556 = vadd.f32 0.0, %v555
    %v557 = vpop.f32.mrb[0].mxu0
    %558 = vdwg.mxu0
    %v559 = vmul.f32 %v551, %v232
    %v560 = vmul.f32 %v556, %v237
    %v561 = vsel %vm79, %v559, 0.0
    %v562 = vrot.slane %v561, 4
    %v563 = vadd.f32 %v561, %v562
    %v564 = vrot.slane %v563, 2
    %v565 = vadd.f32 %v563, %v564
    %v566 = vrot.slane %v565, 1
    %v567 = vadd.f32 %v565, %v566
    %v568 = vsel %vm79, %v560, 0.0
    %v569 = vrot.slane %v568, 4
    %v570 = vadd.f32 %v568, %v569
    %v571 = vrot.slane %v570, 2
    %v572 = vadd.f32 %v570, %v571
    %v573 = vrot.slane %v572, 1
    %v574 = vadd.f32 %v572, %v573
    %v575 = vld [vmem:[#allocation5] sm:$0xff]
    %v576 = vld [vmem:[#allocation5 + $0x8] sm:$0xff]
    %v577 = vld [vmem:[#allocation5 + $0x10] sm:$0xff]
    %v578 = vld [vmem:[#allocation5 + $0x18] sm:$0xff]
    %v579 = vld [vmem:[#allocation7] sm:$0x1]
    %v581 = vlaneseq
    %v582 = vshrl.u32 %v581, 7
    %v583 = vsub.s32 0, %v582
    %v584 = vrot.slane %v579, %v583
    %vm588 = vcmask 1041409
    %v589 = vsel %vm588, %v574, %v567
    %v590 = vsel %vm79, %v589, 0
    %592 = vmatprep.subr.mxu0 0.0
    %593 = vmatpush1.msra.mxu0 %v575
    %594 = vmatprep.subr.mxu0 0.0
    %595 = vmatpush1.msra.mxu0 %v576
    %596 = vmatprep.subr.mxu0 0.0
    %597 = vmatpush1.msra.mxu0 %v577
    %598 = vmatprep.subr.mxu0 0.0
    %599 = vmatpush1.msra.mxu0 %v578
    %600 = vmatprep.subr.mxu0 0.0
    %601 = vmatpush1.msra.mxu0 0.0
    %602 = vmatprep.subr.mxu0 0.0
    %603 = vmatpush1.msra.mxu0 0.0
    %604 = vmatprep.subr.mxu0 0.0
    %605 = vmatpush1.msra.mxu0 0.0
    %606 = vmatprep.subr.mxu0 0.0
    %607 = vmatpush1.msra.mxu0 0.0
    %608 = vmatprep.subr.mxu0 0.0
    %609 = vmatpush1.msra.mxu0 0.0
    %610 = vmatprep.subr.mxu0 0.0
    %611 = vmatpush1.msra.mxu0 0.0
    %612 = vmatprep.subr.mxu0 0.0
    %613 = vmatpush1.msra.mxu0 0.0
    %614 = vmatprep.subr.mxu0 0.0
    %615 = vmatpush1.msra.mxu0 0.0
    %616 = vmatprep.subr.mxu0 0.0
    %617 = vmatpush1.msra.mxu0 0.0
    %618 = vmatprep.subr.mxu0 0.0
    %619 = vmatpush1.msra.mxu0 0.0
    %620 = vmatprep.subr.mxu0 0.0
    %621 = vmatpush1.msra.mxu0 0.0
    %622 = vmatprep.subr.mxu0 0.0
    %623 = vmatpush1.msra.mxu0 0.0
    %624 = vmatprep.subr.mxu0 0.0
    %625 = vmatpush1.msra.mxu0 0.0
    %626 = vmatprep.subr.mxu0 0.0
    %627 = vmatpush1.msra.mxu0 0.0
    %628 = vmatprep.subr.mxu0 0.0
    %629 = vmatpush1.msra.mxu0 0.0
    %630 = vmatprep.subr.mxu0 0.0
    %631 = vmatpush1.msra.mxu0 0.0
    %632 = vmatprep.subr.mxu0 0.0
    %633 = vmatpush1.msra.mxu0 0.0
    %634 = vmatprep.subr.mxu0 0.0
    %635 = vmatpush1.msra.mxu0 0.0
    %636 = vmatprep.subr.mxu0 0.0
    %637 = vmatpush1.msra.mxu0 0.0
    %638 = vmatprep.subr.mxu0 0.0
    %639 = vmatpush1.msra.mxu0 0.0
    %640 = vmatprep.subr.mxu0 0.0
    %641 = vmatpush1.msra.mxu0 0.0
    %642 = vmatprep.subr.mxu0 0.0
    %643 = vmatpush1.msra.mxu0 0.0
    %644 = vmatprep.subr.mxu0 0.0
    %645 = vmatpush1.msra.mxu0 0.0
    %646 = vmatprep.subr.mxu0 0.0
    %647 = vmatpush1.msra.mxu0 0.0
    %648 = vmatprep.subr.mxu0 0.0
    %649 = vmatpush1.msra.mxu0 0.0
    %650 = vmatprep.subr.mxu0 0.0
    %651 = vmatpush1.msra.mxu0 0.0
    %652 = vmatprep.subr.mxu0 0.0
    %653 = vmatpush1.msra.mxu0 0.0
    %654 = vmatprep.subr.mxu0 0.0
    %655 = vmatpush1.msra.mxu0 0.0
    %656 = vmatprep.mubr.f32.mxu0 0.0
    %657 = vmatmul.mubr.f32.gmra.mrb[0].mxu0 %v590
    %v658 = vpop.f32.mrb[0].mxu0
    %v659 = vadd.f32 %v584, %v658
    %v660 = vpop.f32.mrb[0].mxu0
    %661 = vdwg.mxu0
    %vm662 = vcmask 254976
    %663 = vst.msk [vmem:[#allocation8] sm:$0x3] %vm662, %v659
    // Predicated region
    $region50: #{cross_attention.1} parent=1 // pred_check
      _
    $region51: #{cross_attention.1} parent=1 // pred_check_branch
      %665 = sbr.rel (0) target = $region53
    $region52: #{cross_attention.1} parent=1 // pred_region
      %s667 = ssub.s32 32, 32
      %668 = vsyncadd [#allocation4], %s667
      %s670 = sshll.u32 [#allocation8], 4
      %s671 = int_to_ptr.vmem [resolvable:$true] %s670
      %673 = dma.vmem_to_hbm [thread:$0]  %s671, 32, %s9, [#allocation4]
    $region53: #{cross_attention.1} parent=1 // pred_fallthru
      _
    // Predicated region
    $region54: #{cross_attention.1} parent=1 // pred_check
      _
    $region55: #{cross_attention.1} parent=1 // pred_check_branch
      %675 = sbr.rel (0) target = $region57
    $region56: #{cross_attention.1} parent=1 // pred_region
      %676 = dma.done [#allocation4], 32
    $region57: #{cross_attention.1} parent=1 // pred_fallthru
      _
    %677 = vsyncpa [#allocation3], 1
    %678 = vsyncpa [#allocation6], 1
    %679 = vsyncpa [#allocation4], 1

</llo_original>
